<compile_context>
chip_gen: v7x
topology: tpu7x:2x2x1
jax: 0.10.0
libtpu: 0.0.40
codegen_flags: <defaults>
</compile_context>

<pallas_src>
import functools
import math

import jax
import jax.numpy as jnp
from jax import lax
from jax.experimental import pallas as pl
from jax.experimental.pallas import tpu as pltpu


def _sepconv_kernel(x_ref, wd_ref, wm_ref, bm_ref, o_ref, prev_ref, *, K, TL):
    # x_ref : (1, C_in, TL)   current L tile of one batch element
    # wd_ref: (C_in, K)       depthwise kernel
    # wm_ref: (C_out, C_in)   channel-mixer weight
    # bm_ref: (C_out, 1)      effective bias = Wm @ b_dw + b_mix
    # o_ref : (1, C_out, TL)
    # prev_ref: (C_in, TL) f32 scratch, carries the previous L tile (causal halo)
    li = pl.program_id(1)

    @pl.when(li == 0)
    def _():
        # Causal left padding: the (virtual) tile before the first one is zero.
        prev_ref[...] = jnp.zeros_like(prev_ref)

    x = x_ref[0].astype(jnp.float32)              # (C_in, TL)
    wd = wd_ref[...].astype(jnp.float32)          # (C_in, K)
    prev = prev_ref[...]                          # (C_in, TL) f32

    lane = lax.broadcasted_iota(jnp.int32, x.shape, 1)

    # Tap K-1 needs no shift.
    acc = wd[:, K - 1:K] * x
    # Taps 0..K-2: shift right in time by s = K-1-k.  Lanes [s:] come from the
    # current tile (pltpu.roll wrap), lanes [:s] from the carried previous tile.
    for k in range(K - 1):
        s = K - 1 - k
        cur_r = pltpu.roll(x, shift=s, axis=1)
        prv_r = pltpu.roll(prev, shift=s, axis=1)
        shifted = jnp.where(lane >= s, cur_r, prv_r)
        acc = acc + wd[:, k:k + 1] * shifted

    # Carry this tile's data for the next L tile of the same batch element.
    prev_ref[...] = x

    # Pointwise channel mixer: (C_out, C_in) @ (C_in, TL) on the MXU.
    out = jnp.dot(wm_ref[...].astype(jnp.float32), acc,
                  preferred_element_type=jnp.float32)
    out = out + bm_ref[...].astype(jnp.float32)   # (C_out, TL)
    o_ref[0] = out.astype(o_ref.dtype)


def _choose_tile_l(L, C_in, C_out, max_tile=2048, budget_bytes=10 << 20):
    """Largest multiple-of-128 L tile that fits a conservative fp32 VMEM budget.

    Budget per output lane (fp32 bytes): 2x double-buffered input (C_in) +
    2x double-buffered output (C_out) + prev-tile carry (C_in) + ~2x C_in of
    f32 temporaries (cast + accumulator).  Kept well under the scoped-VMEM
    default of every generation (v5e 16 MiB / v6e 32 MiB / v7x 32 MiB).
    """
    per_lane = 4 * (2 * C_in + 2 * C_out + 3 * C_in)
    cap = max(128, min(max_tile, (budget_bytes // per_lane) // 128 * 128))
    cap = min(cap, -(-L // 128) * 128)
    # Prefer a tile that divides L exactly (avoids any padding copy).
    for t in range(cap, 127, -128):
        if L % t == 0:
            return t
    return cap


def separable_conv(x, w_dw, b_dw, w_mix, b_mix, *, tile_l=None):
    """x: (B, C_in, L) float. Returns (B, C_out, L)."""
    B, C_in, L = x.shape
    K = w_dw.shape[-1]
    C_out = w_mix.shape[0]

    wd = w_dw.reshape(C_in, K)                    # (1, C_in, K) -> (C_in, K)
    wm = w_mix.reshape(C_out, C_in)               # Linear1d weight (C_out, C_in, 1)
    # Fold the depthwise bias into the mixer bias (both are linear):
    #   Wm @ (dw + b_dw) + b_mix == Wm @ dw + (Wm @ b_dw + b_mix)
    bm = (wm.astype(jnp.float32) @ b_dw.reshape(C_in, 1).astype(jnp.float32)
          + b_mix.reshape(C_out, 1).astype(jnp.float32))

    if tile_l is None:
        tile_l = _choose_tile_l(L, C_in, C_out)
    assert tile_l % 128 == 0
    assert K - 1 <= tile_l, "causal halo must fit within one previous L tile"

    L_pad = pl.cdiv(L, tile_l) * tile_l
    if L_pad != L:
        # TODO(synk): a ragged last tile (masked store) would avoid this copy;
        # right-pad with zeros (cannot affect earlier outputs: conv is causal).
        x_in = jnp.pad(x, ((0, 0), (0, 0), (0, L_pad - L)))
    else:
        x_in = x
    n_l = L_pad // tile_l

    kernel = functools.partial(_sepconv_kernel, K=K, TL=tile_l)

    out = pl.pallas_call(
        kernel,
        out_shape=jax.ShapeDtypeStruct((B, C_out, L_pad), x.dtype),
        grid_spec=pltpu.PrefetchScalarGridSpec(
            num_scalar_prefetch=0,
            grid=(B, n_l),
            in_specs=[
                pl.BlockSpec((1, C_in, tile_l), lambda b, l: (b, 0, l)),
                pl.BlockSpec((C_in, K), lambda b, l: (0, 0)),
                pl.BlockSpec((C_out, C_in), lambda b, l: (0, 0)),
                pl.BlockSpec((C_out, 1), lambda b, l: (0, 0)),
            ],
            out_specs=pl.BlockSpec((1, C_out, tile_l), lambda b, l: (b, 0, l)),
            scratch_shapes=[pltpu.VMEM((C_in, tile_l), jnp.float32)],
        ),
        compiler_params=pltpu.CompilerParams(
            # B tiles are independent (megacore-parallel on v7x); the L axis
            # carries the causal halo in scratch so it must stay sequential.
            dimension_semantics=("parallel", "arbitrary"),
            # 32 MiB is <= physical VMEM on v5e/v6e (128 MiB) and v7x (64 MiB),
            # and raises v5e's 16 MiB scoped default so the tile double-buffers.
            vmem_limit_bytes=32 * 1024 * 1024,
        ),
    )(x_in, wd, wm, bm)

    return out[..., :L] if L_pad != L else out


def init_params(key, in_channels, out_channels, kernel_size):
    """Deterministic init mirroring the PyTorch module's __init__ shapes."""
    k1, k2, k3 = jax.random.split(key, 3)

    # Depthwise weight: (1, in_channels, kernel_size), kaiming_uniform(a=sqrt(5)).
    fan_in = in_channels * kernel_size
    gain = math.sqrt(2.0 / (1.0 + 5.0))           # a = sqrt(5)
    bound_w = gain * math.sqrt(3.0 / fan_in)
    w_dw = jax.random.uniform(k1, (1, in_channels, kernel_size),
                              jnp.float32, -bound_w, bound_w)

    # Depthwise bias: uniform(-1/sqrt(fan_in), 1/sqrt(fan_in)).
    bound_b = 1.0 / math.sqrt(fan_in)
    b_dw = jax.random.uniform(k2, (in_channels,), jnp.float32, -bound_b, bound_b)

    # Channel mixer (Linear1d): weight (out, in, 1), kaiming_uniform 'linear'; bias 0.
    bound_m = 1.0 * math.sqrt(3.0 / in_channels)
    w_mix = jax.random.uniform(k3, (out_channels, in_channels, 1),
                               jnp.float32, -bound_m, bound_m)
    b_mix = jnp.zeros((out_channels,), jnp.float32)
    return w_dw, b_dw, w_mix, b_mix


def reference(x, w_dw, b_dw, w_mix, b_mix):
    B, C_in, L = x.shape
    K = w_dw.shape[-1]
    xp = jnp.pad(x, ((0, 0), (0, 0), (K - 1, 0)))
    wd = w_dw.reshape(C_in, K)
    dw = sum(wd[None, :, k:k + 1] * xp[:, :, k:k + L] for k in range(K))
    dw = dw + b_dw[None, :, None]
    out = jnp.einsum('oc,bcl->bol', w_mix.reshape(w_mix.shape[0], C_in), dw)
    return out + b_mix[None, :, None]


if __name__ == "__main__":
    B, C_in, C_out, L, K = 2, 8, 16, 384, 5

    key = jax.random.PRNGKey(0)
    kx, kp = jax.random.split(key)
    x = jax.random.normal(kx, (B, C_in, L), jnp.float32)
    w_dw, b_dw, w_mix, b_mix = init_params(kp, C_in, C_out, K)

    ref = reference(x, w_dw, b_dw, w_mix, b_mix)

    # Forced small tile (128) -> 3 L tiles per batch element, exercising the
    # carried causal halo and its per-batch reset.
    out_tiled = jax.block_until_ready(
        separable_conv(x, w_dw, b_dw, w_mix, b_mix, tile_l=128))
    assert out_tiled.shape == (B, C_out, L)
    assert jnp.allclose(out_tiled, ref, atol=1e-4, rtol=1e-4)

    # Default (auto-chosen) tile size.
    out_auto = jax.block_until_ready(separable_conv(x, w_dw, b_dw, w_mix, b_mix))
    assert out_auto.shape == (B, C_out, L)
    assert jnp.allclose(out_auto, ref, atol=1e-4, rtol=1e-4)

    print("KERNEL_OK")
</pallas_src>

<mosaic_0001>
module attributes {stable_mosaic.version = 11 : i64} {
  func.func @_sepconv_kernel(%arg0: i32, %arg1: i32, %arg2: memref<1x8x128xf32, #tpu.memory_space<vmem>>, %arg3: memref<8x5xf32, #tpu.memory_space<vmem>>, %arg4: memref<16x8xf32, #tpu.memory_space<vmem>>, %arg5: memref<16x1xf32, #tpu.memory_space<vmem>>, %arg6: memref<1x16x128xf32, #tpu.memory_space<vmem>>, %arg7: memref<8x128xf32, #tpu.memory_space<vmem>>) attributes {dimension_semantics = [#tpu.dimension_semantics<parallel>, #tpu.dimension_semantics<arbitrary>], iteration_bounds = array<i64: 2, 3>, scalar_prefetch = 0 : i64, scratch_operands = 1 : i64, tpu.core_type = #tpu.core_type<tc>, window_params = [{transform_indices = @transform_0, window_bounds = array<i64: 1, 8, 128>}, {pipeline_mode = #tpu.pipeline_mode<synchronous>, transform_indices = @transform_1, window_bounds = array<i64: 8, 5>}, {pipeline_mode = #tpu.pipeline_mode<synchronous>, transform_indices = @transform_2, window_bounds = array<i64: 16, 8>}, {pipeline_mode = #tpu.pipeline_mode<synchronous>, transform_indices = @transform_3, window_bounds = array<i64: 16, 1>}, {transform_indices = @transform_4, window_bounds = array<i64: 1, 16, 128>}]} {
    %c0_i32 = arith.constant 0 : i32
    %0 = arith.cmpi eq, %arg1, %c0_i32 : i32
    %1 = arith.extui %0 : i1 to i32
    %c0_i32_0 = arith.constant 0 : i32
    %2 = arith.cmpi ne, %1, %c0_i32_0 : i32
    scf.if %2 {
      %cst_24 = arith.constant 0.000000e+00 : f32
      %56 = vector.broadcast %cst_24 : f32 to vector<8x128xf32>
      %c0_25 = arith.constant 0 : index
      %c0_26 = arith.constant 0 : index
      %57 = vector.load %arg7[%c0_25, %c0_26] : memref<8x128xf32, #tpu.memory_space<vmem>>, vector<8x128xf32>
      tpu.vector_store %arg7[%c0_25, %c0_26], %56 {strides = array<i32>} : memref<8x128xf32, #tpu.memory_space<vmem>>, vector<8x128xf32>,
    } else {
    }
    %c0 = arith.constant 0 : index
    %c0_1 = arith.constant 0 : index
    %c0_2 = arith.constant 0 : index
    %3 = vector.load %arg2[%c0, %c0_1, %c0_2] : memref<1x8x128xf32, #tpu.memory_space<vmem>>, vector<1x8x128xf32>
    %4 = vector.shape_cast %3 : vector<1x8x128xf32> to vector<8x128xf32>
    %c0_3 = arith.constant 0 : index
    %c0_4 = arith.constant 0 : index
    %5 = vector.load %arg3[%c0_3, %c0_4] : memref<8x5xf32, #tpu.memory_space<vmem>>, vector<8x5xf32>
    %c0_5 = arith.constant 0 : index
    %c0_6 = arith.constant 0 : index
    %6 = vector.load %arg7[%c0_5, %c0_6] : memref<8x128xf32, #tpu.memory_space<vmem>>, vector<8x128xf32>
    %7 = tpu.iota {dimensions = array<i32: 1>} : vector<8x128xi32>
    %8 = vector.extract_strided_slice %5 {offsets = [0, 4], sizes = [8, 1], strides = [1, 1]} : vector<8x5xf32> to vector<8x1xf32>
    %9 = vector.broadcast %8 : vector<8x1xf32> to vector<8x128xf32>
    %10 = arith.mulf %9, %4 : vector<8x128xf32>
    %c4_i32 = arith.constant 4 : i32
    %11 = tpu.dynamic_rotate %4 by %c4_i32 dim 1 : vector<8x128xf32>, i32 -> vector<8x128xf32>
    %c4_i32_7 = arith.constant 4 : i32
    %12 = tpu.dynamic_rotate %6 by %c4_i32_7 dim 1 : vector<8x128xf32>, i32 -> vector<8x128xf32>
    %c4_i32_8 = arith.constant 4 : i32
    %13 = vector.broadcast %c4_i32_8 : i32 to vector<8x128xi32>
    %14 = arith.cmpi sge, %7, %13 : vector<8x128xi32>
    %15 = arith.select %14, %11, %12 : vector<8x128xi1>, vector<8x128xf32>
    %16 = vector.extract_strided_slice %5 {offsets = [0, 0], sizes = [8, 1], strides = [1, 1]} : vector<8x5xf32> to vector<8x1xf32>
    %17 = vector.broadcast %16 : vector<8x1xf32> to vector<8x128xf32>
    %18 = arith.mulf %17, %15 : vector<8x128xf32>
    %19 = arith.addf %10, %18 : vector<8x128xf32>
    %c3_i32 = arith.constant 3 : i32
    %20 = tpu.dynamic_rotate %4 by %c3_i32 dim 1 : vector<8x128xf32>, i32 -> vector<8x128xf32>
    %c3_i32_9 = arith.constant 3 : i32
    %21 = tpu.dynamic_rotate %6 by %c3_i32_9 dim 1 : vector<8x128xf32>, i32 -> vector<8x128xf32>
    %c3_i32_10 = arith.constant 3 : i32
    %22 = vector.broadcast %c3_i32_10 : i32 to vector<8x128xi32>
    %23 = arith.cmpi sge, %7, %22 : vector<8x128xi32>
    %24 = arith.select %23, %20, %21 : vector<8x128xi1>, vector<8x128xf32>
    %25 = vector.extract_strided_slice %5 {offsets = [0, 1], sizes = [8, 1], strides = [1, 1]} : vector<8x5xf32> to vector<8x1xf32>
    %26 = vector.broadcast %25 : vector<8x1xf32> to vector<8x128xf32>
    %27 = arith.mulf %26, %24 : vector<8x128xf32>
    %28 = arith.addf %19, %27 : vector<8x128xf32>
    %c2_i32 = arith.constant 2 : i32
    %29 = tpu.dynamic_rotate %4 by %c2_i32 dim 1 : vector<8x128xf32>, i32 -> vector<8x128xf32>
    %c2_i32_11 = arith.constant 2 : i32
    %30 = tpu.dynamic_rotate %6 by %c2_i32_11 dim 1 : vector<8x128xf32>, i32 -> vector<8x128xf32>
    %c2_i32_12 = arith.constant 2 : i32
    %31 = vector.broadcast %c2_i32_12 : i32 to vector<8x128xi32>
    %32 = arith.cmpi sge, %7, %31 : vector<8x128xi32>
    %33 = arith.select %32, %29, %30 : vector<8x128xi1>, vector<8x128xf32>
    %34 = vector.extract_strided_slice %5 {offsets = [0, 2], sizes = [8, 1], strides = [1, 1]} : vector<8x5xf32> to vector<8x1xf32>
    %35 = vector.broadcast %34 : vector<8x1xf32> to vector<8x128xf32>
    %36 = arith.mulf %35, %33 : vector<8x128xf32>
    %37 = arith.addf %28, %36 : vector<8x128xf32>
    %c1_i32 = arith.constant 1 : i32
    %38 = tpu.dynamic_rotate %4 by %c1_i32 dim 1 : vector<8x128xf32>, i32 -> vector<8x128xf32>
    %c1_i32_13 = arith.constant 1 : i32
    %39 = tpu.dynamic_rotate %6 by %c1_i32_13 dim 1 : vector<8x128xf32>, i32 -> vector<8x128xf32>
    %c1_i32_14 = arith.constant 1 : i32
    %40 = vector.broadcast %c1_i32_14 : i32 to vector<8x128xi32>
    %41 = arith.cmpi sge, %7, %40 : vector<8x128xi32>
    %42 = arith.select %41, %38, %39 : vector<8x128xi1>, vector<8x128xf32>
    %43 = vector.extract_strided_slice %5 {offsets = [0, 3], sizes = [8, 1], strides = [1, 1]} : vector<8x5xf32> to vector<8x1xf32>
    %44 = vector.broadcast %43 : vector<8x1xf32> to vector<8x128xf32>
    %45 = arith.mulf %44, %42 : vector<8x128xf32>
    %46 = arith.addf %37, %45 : vector<8x128xf32>
    %c0_15 = arith.constant 0 : index
    %c0_16 = arith.constant 0 : index
    %47 = vector.load %arg7[%c0_15, %c0_16] : memref<8x128xf32, #tpu.memory_space<vmem>>, vector<8x128xf32>
    tpu.vector_store %arg7[%c0_15, %c0_16], %4 {strides = array<i32>} : memref<8x128xf32, #tpu.memory_space<vmem>>, vector<8x128xf32>,
    %c0_17 = arith.constant 0 : index
    %c0_18 = arith.constant 0 : index
    %48 = vector.load %arg4[%c0_17, %c0_18] : memref<16x8xf32, #tpu.memory_space<vmem>>, vector<16x8xf32>
    %cst = arith.constant dense<0.000000e+00> : vector<16x128xf32>
    %49 = tpu.matmul %48, %46, %cst {dimension_numbers = #tpu.dot_dimension_numbers<[1], [0], [0], [1], [0, 0, 1, 1], [], []>} : vector<16x8xf32>, vector<8x128xf32>, vector<16x128xf32> -> vector<16x128xf32>
    %c0_19 = arith.constant 0 : index
    %c0_20 = arith.constant 0 : index
    %50 = vector.load %arg5[%c0_19, %c0_20] : memref<16x1xf32, #tpu.memory_space<vmem>>, vector<16x1xf32>
    %51 = vector.broadcast %50 : vector<16x1xf32> to vector<16x128xf32>
    %52 = arith.addf %49, %51 : vector<16x128xf32>
    %c0_21 = arith.constant 0 : index
    %c0_22 = arith.constant 0 : index
    %c0_23 = arith.constant 0 : index
    %53 = vector.load %arg6[%c0_21, %c0_22, %c0_23] : memref<1x16x128xf32, #tpu.memory_space<vmem>>, vector<1x16x128xf32>
    %54 = vector.shape_cast %53 : vector<1x16x128xf32> to vector<16x128xf32>
    %55 = vector.shape_cast %52 : vector<16x128xf32> to vector<1x16x128xf32>
    tpu.vector_store %arg6[%c0_21, %c0_22, %c0_23], %55 {strides = array<i32>} : memref<1x16x128xf32, #tpu.memory_space<vmem>>, vector<1x16x128xf32>,
    return
  }
  func.func @transform_0(%arg0: i32, %arg1: i32) -> (i32, i32, i32) {
    %c0_i32 = arith.constant 0 : i32
    %c0_i32_0 = arith.constant 0 : i32
    return %arg0, %c0_i32, %arg1 : i32, i32, i32
  }
  func.func @transform_1(%arg0: i32, %arg1: i32) -> (i32, i32) {
    %c0_i32 = arith.constant 0 : i32
    %c0_i32_0 = arith.constant 0 : i32
    %c0_i32_1 = arith.constant 0 : i32
    return %c0_i32, %c0_i32_0 : i32, i32
  }
  func.func @transform_2(%arg0: i32, %arg1: i32) -> (i32, i32) {
    %c0_i32 = arith.constant 0 : i32
    %c0_i32_0 = arith.constant 0 : i32
    %c0_i32_1 = arith.constant 0 : i32
    return %c0_i32, %c0_i32_0 : i32, i32
  }
  func.func @transform_3(%arg0: i32, %arg1: i32) -> (i32, i32) {
    %c0_i32 = arith.constant 0 : i32
    %c0_i32_0 = arith.constant 0 : i32
    %c0_i32_1 = arith.constant 0 : i32
    return %c0_i32, %c0_i32_0 : i32, i32
  }
  func.func @transform_4(%arg0: i32, %arg1: i32) -> (i32, i32, i32) {
    %c0_i32 = arith.constant 0 : i32
    %c0_i32_0 = arith.constant 0 : i32
    return %arg0, %c0_i32, %arg1 : i32, i32, i32
  }
}

</mosaic_0001>

<llo_original>
// kernel: tpu_custom_call.1
$region0: #{tpu_custom_call.1}
  #allocation0 [shape = 'u32[]', space=smem, size = 0x4, offset = 0x4, fixed_abs, tag = 'smem constant byte address 0x4 - core index']
  #allocation1 [shape = 'u32[144,128]{1,0:T(1,128)}', space=vmem, size = 0x12000, scoped, tag = 'internal scratch']
  #allocation2 [shape = 'f32[8,128]{1,0:T(8,128)}', space=vmem, size = 0x1000, scoped, tag = 'scratch operand']
  %s0 = inlined_call_operand.hbm [shape: f32[2,8,384], index: 0, kind: input, shape index: {}]
  %s1 = inlined_call_operand.vmem [shape: f32[8,5], index: 1, kind: input, shape index: {}]
  %s2 = inlined_call_operand.vmem [shape: f32[16,8], index: 2, kind: input, shape index: {}]
  %s3 = inlined_call_operand.vmem [shape: f32[16,1], index: 3, kind: input, shape index: {}]
  %s4 = inlined_call_operand.hbm [shape: f32[2,16,384], index: 4, kind: output, shape index: {}]
  %s5 = sld [smem:[#allocation0]]
  $region57: #{tpu_custom_call.1} parent=0
    _
  %s7 = ssub.s32 1, %s5
  %s8 = scalar_select 0, %s7, %s5
  $region1: #{tpu_custom_call.1} parent=0
    #allocation3 [shape = 'u8[8192]{0}', space=vmem, size = 0x2000, scoped, tag = 'input window, operand 0']
    #allocation4 [shape = 's32[2]{0}', space=sflag, size = 0x8, scoped, tag = 'scoped memory for tpu_custom_call.1']
    #allocation5 [shape = 's32[2]{0}', space=sflag, size = 0x8, scoped, tag = 'scoped memory for tpu_custom_call.1']
    #allocation6 [shape = 'u8[16384]{0}', space=vmem, size = 0x4000, scoped, tag = 'output window, operand 0']
    %9 = vsyncpa [#allocation4], 0
    %s10 = scalar_lea.sflag [#allocation4], 1
    %11 = vsyncpa %s10, 0
    %12 = vsyncpa [#allocation5], 0
    %s13 = scalar_lea.sflag [#allocation5], 1
    %14 = vsyncpa %s13, 0
    loop: start=0, step=1, limit=8
    $region2: #{tpu_custom_call.1} parent=1 // loop_pre_header
      _
    $region3: #{tpu_custom_call.1} parent=1 // loop_header
      %s16 = sphi 0, %s20
      %p17 = scmp.ge.s32.totalorder %s16, 8
      %s23 = sphi 0, %s35
      %s24 = sphi 0, %s31
      %s25 = sphi 0, %s23
      %s26 = sphi 0, %s24
      %s27 = sphi 0, %s25
      %s28 = sphi 0, %s26
      %s40 = sphi 0, %s42
      %s43 = sphi 0, %s40
      %s44 = sphi 0, %s43
      %s60 = sphi 0, %s44
      %s64 = sphi 0, %s64
      %s66 = sphi 0, %s64
      %s67 = sphi 0, %s66
      %s81 = sphi 0, %s67
      %s85 = sphi 0, %s85
      %s87 = sphi 0, %s85
      %s88 = sphi 0, %s87
      %s102 = sphi 0, %s88
      %s106 = sphi 0, %s106
      %s108 = sphi 0, %s106
      %s109 = sphi 0, %s108
      %s123 = sphi 0, %s109
      %s131 = sphi 0, %s133
      %s134 = sphi 0, %s131
      %s135 = sphi 0, %s134
      %s151 = sphi 0, %s135
    $region4: #{tpu_custom_call.1} parent=1 // loop_header_branch
      %19 = sbr.rel (%p17) target = $region8
    $region5: #{tpu_custom_call.1} parent=1 // loop_body
      %s21 = ssub.s32 %s16, 1
      %s22 = ssub.s32 %s16, 2
      %s29 = sadd.s32 1, %s24
      %p30 = scmp.ge.s32.totalorder %s29, 3
      %s31 = scalar_select %p30, 0, %s29
      %s32 = sadd.s32 1, %s23
      %s33 = scalar_select %p30, %s32, %s23
      %p34 = scmp.ge.s32.totalorder %s33, 2
      %s35 = scalar_select %p34, 0, %s33
      %s36 = ssub.s32 %s23, %s35
      %s37 = ssub.s32 %s24, %s31
      %s38 = sor.u32 %s36, %s37
      %p39 = scmp.eq.s32.totalorder %s38, 0
      %s41 = sadd.s32 %s40, 1
      %s42 = scalar_select %p39, %s40, %s41
      %p45 = pneg %p39
      %p46 = scmp.eq.s32.totalorder %s16, 5
      %p47 = por %p45, %p46
      %p48 = scmp.ne.s32.totalorder %s40, %s43
      %p49 = scmp.eq.s32.totalorder %s16, 0
      %p50 = por %p48, %p49
      %p51 = scmp.ne.s32.totalorder %s40, %s43
      %p52 = scmp.eq.s32.totalorder %s21, 5
      %p53 = por %p51, %p52
      %p54 = scmp.ne.s32.totalorder %s43, %s44
      %p55 = scmp.eq.s32.totalorder %s21, 0
      %p56 = por %p54, %p55
      %p57 = scmp.ne.s32.totalorder %s43, %s44
      %p58 = scmp.eq.s32.totalorder %s22, 5
      %p59 = por %p57, %p58
      %p61 = scmp.ne.s32.totalorder %s44, %s60
      %p62 = scmp.eq.s32.totalorder %s22, 0
      %p63 = por %p61, %p62
      %s65 = sadd.s32 %s64, 1
      %p68 = scmp.eq.s32.totalorder %s16, 5
      %p69 = scmp.ne.s32.totalorder %s64, %s66
      %p70 = scmp.eq.s32.totalorder %s16, 0
      %p71 = por %p69, %p70
      %p72 = scmp.ne.s32.totalorder %s64, %s66
      %p73 = scmp.eq.s32.totalorder %s21, 5
      %p74 = por %p72, %p73
      %p75 = scmp.ne.s32.totalorder %s66, %s67
      %p76 = scmp.eq.s32.totalorder %s21, 0
      %p77 = por %p75, %p76
      %p78 = scmp.ne.s32.totalorder %s66, %s67
      %p79 = scmp.eq.s32.totalorder %s22, 5
      %p80 = por %p78, %p79
      %p82 = scmp.ne.s32.totalorder %s67, %s81
      %p83 = scmp.eq.s32.totalorder %s22, 0
      %p84 = por %p82, %p83
      %s86 = sadd.s32 %s85, 1
      %p89 = scmp.eq.s32.totalorder %s16, 5
      %p90 = scmp.ne.s32.totalorder %s85, %s87
      %p91 = scmp.eq.s32.totalorder %s16, 0
      %p92 = por %p90, %p91
      %p93 = scmp.ne.s32.totalorder %s85, %s87
      %p94 = scmp.eq.s32.totalorder %s21, 5
      %p95 = por %p93, %p94
      %p96 = scmp.ne.s32.totalorder %s87, %s88
      %p97 = scmp.eq.s32.totalorder %s21, 0
      %p98 = por %p96, %p97
      %p99 = scmp.ne.s32.totalorder %s87, %s88
      %p100 = scmp.eq.s32.totalorder %s22, 5
      %p101 = por %p99, %p100
      %p103 = scmp.ne.s32.totalorder %s88, %s102
      %p104 = scmp.eq.s32.totalorder %s22, 0
      %p105 = por %p103, %p104
      %s107 = sadd.s32 %s106, 1
      %p110 = scmp.eq.s32.totalorder %s16, 5
      %p111 = scmp.ne.s32.totalorder %s106, %s108
      %p112 = scmp.eq.s32.totalorder %s16, 0
      %p113 = por %p111, %p112
      %p114 = scmp.ne.s32.totalorder %s106, %s108
      %p115 = scmp.eq.s32.totalorder %s21, 5
      %p116 = por %p114, %p115
      %p117 = scmp.ne.s32.totalorder %s108, %s109
      %p118 = scmp.eq.s32.totalorder %s21, 0
      %p119 = por %p117, %p118
      %p120 = scmp.ne.s32.totalorder %s108, %s109
      %p121 = scmp.eq.s32.totalorder %s22, 5
      %p122 = por %p120, %p121
      %p124 = scmp.ne.s32.totalorder %s109, %s123
      %p125 = scmp.eq.s32.totalorder %s22, 0
      %p126 = por %p124, %p125
      %s127 = ssub.s32 %s23, %s35
      %s128 = ssub.s32 %s24, %s31
      %s129 = sor.u32 %s127, %s128
      %p130 = scmp.eq.s32.totalorder %s129, 0
      %s132 = sadd.s32 %s131, 1
      %s133 = scalar_select %p130, %s131, %s132
      %p136 = pneg %p130
      %p137 = scmp.eq.s32.totalorder %s16, 5
      %p138 = por %p136, %p137
      %p139 = scmp.ne.s32.totalorder %s131, %s134
      %p140 = scmp.eq.s32.totalorder %s16, 0
      %p141 = por %p139, %p140
      %p142 = scmp.ne.s32.totalorder %s131, %s134
      %p143 = scmp.eq.s32.totalorder %s21, 5
      %p144 = por %p142, %p143
      %p145 = scmp.ne.s32.totalorder %s134, %s135
      %p146 = scmp.eq.s32.totalorder %s21, 0
      %p147 = por %p145, %p146
      %p148 = scmp.ne.s32.totalorder %s134, %s135
      %p149 = scmp.eq.s32.totalorder %s22, 5
      %p150 = por %p148, %p149
      %p152 = scmp.ne.s32.totalorder %s135, %s151
      %p153 = scmp.eq.s32.totalorder %s22, 0
      %p154 = por %p152, %p153
      %p155 = scmp.le.s32.totalorder 1, %s16
      %p156 = scmp.lt.s32.totalorder %s16, 7
      %p157 = pnand %p155, %p156
      %p158 = pneg %p157
      // Predicated region
      $region9: #{tpu_custom_call.1} parent=5 // pred_check
        _
      $region10: #{tpu_custom_call.1} parent=5 // pred_check_branch
        %160 = sbr.rel (%p157) target = $region12
      $region11: #{tpu_custom_call.1} parent=5 // pred_region
        %s161 = ssub.s32 %s16, 1
        // Predicated region
        $region13: #{tpu_custom_call.1} parent=11 // pred_check
          %p162 = pneg %p77
        $region14: #{tpu_custom_call.1} parent=11 // pred_check_branch
          %164 = sbr.rel (%p162) target = $region16
        $region15: #{tpu_custom_call.1} parent=11 // pred_region
          _
        $region16: #{tpu_custom_call.1} parent=11 // pred_fallthru
          _
        // Predicated region
        $region17: #{tpu_custom_call.1} parent=11 // pred_check
          %p165 = pneg %p98
        $region18: #{tpu_custom_call.1} parent=11 // pred_check_branch
          %167 = sbr.rel (%p165) target = $region20
        $region19: #{tpu_custom_call.1} parent=11 // pred_region
          _
        $region20: #{tpu_custom_call.1} parent=11 // pred_fallthru
          _
        // Predicated region
        $region21: #{tpu_custom_call.1} parent=11 // pred_check
          %p168 = pneg %p119
        $region22: #{tpu_custom_call.1} parent=11 // pred_check_branch
          %170 = sbr.rel (%p168) target = $region24
        $region23: #{tpu_custom_call.1} parent=11 // pred_region
          _
        $region24: #{tpu_custom_call.1} parent=11 // pred_fallthru
          _
      $region12: #{tpu_custom_call.1} parent=5 // pred_fallthru
        _
      %p171 = scmp.lt.s32.totalorder %s16, 6
      // Predicated region
      $region25: #{tpu_custom_call.1} parent=5 // pred_check
        %p172 = pneg %p171
      $region26: #{tpu_custom_call.1} parent=5 // pred_check_branch
        %174 = sbr.rel (%p172) target = $region28
      $region27: #{tpu_custom_call.1} parent=5 // pred_region
        // Predicated region
        $region29: #{tpu_custom_call.1} parent=27 // pred_check
          %p175 = pneg %p50
        $region30: #{tpu_custom_call.1} parent=27 // pred_check_branch
          %177 = sbr.rel (%p175) target = $region32
        $region31: #{tpu_custom_call.1} parent=27 // pred_region
          %s178 = sand.u32 %s40, 1
          %s179 = scalar_lea.sflag [#allocation4], %s178
          %s180 = sand.u32 %s40, 1
          %s181 = smul.addr %s180, 8
          %s182 = scalar_lea.vmem [#allocation3], %s181
          %s184 = ssub.s32 128, 128
          %185 = vsyncadd %s179, %s184
          %s186 = smul.addr %s23, 3
          %s187 = sadd.s32 %s24, %s186
          %s188 = smul.addr %s187, 128
          %s189 = scalar_lea.hbm %s0, %s188
          %s191 = sshll.u32 %s182, 4
          %s192 = int_to_ptr.vmem [resolvable:$true] %s191
          %194 = dma.hbm_to_vmem [thread:$0]  %s189, 128, %s192, %s179
        $region32: #{tpu_custom_call.1} parent=27 // pred_fallthru
          _
      $region28: #{tpu_custom_call.1} parent=5 // pred_fallthru
        _
      %p195 = scmp.le.s32.totalorder 1, %s16
      %p196 = scmp.lt.s32.totalorder %s16, 7
      %p197 = pnand %p195, %p196
      %p198 = pneg %p197
      // Predicated region
      $region33: #{tpu_custom_call.1} parent=5 // pred_check
        _
      $region34: #{tpu_custom_call.1} parent=5 // pred_check_branch
        %200 = sbr.rel (%p197) target = $region36
      $region35: #{tpu_custom_call.1} parent=5 // pred_region
        %s201 = ssub.s32 %s16, 1
        %s202 = sand.u32 %s43, 1
        %s203 = scalar_lea.sflag [#allocation4], %s202
        %s204 = sand.u32 %s43, 1
        %s205 = smul.addr %s204, 8
        %s206 = scalar_lea.vmem [#allocation3], %s205
        // Predicated region
        $region37: #{tpu_custom_call.1} parent=35 // pred_check
          %p207 = pneg %p56
        $region38: #{tpu_custom_call.1} parent=35 // pred_check_branch
          %209 = sbr.rel (%p207) target = $region40
        $region39: #{tpu_custom_call.1} parent=35 // pred_region
          %210 = dma.done %s203, 128
        $region40: #{tpu_custom_call.1} parent=35 // pred_fallthru
          _
        %s211 = sand.u32 %s43, 1
        %s212 = scalar_lea.sflag [#allocation4], %s211
        %s213 = sand.u32 %s43, 1
        %s214 = smul.addr %s213, 8
        %s215 = scalar_lea.vmem [#allocation3], %s214
        %p216 = pneg %p56
        %p217 = pneg %p53
        %p218 = pneg %p77
        %p219 = pneg %p74
        %p220 = pneg %p98
        %p221 = pneg %p95
        %p222 = pneg %p119
        %p223 = pneg %p116
        %p224 = pneg %p147
        %p225 = pneg %p144
        %s226 = sand.u32 %s134, 1
        %s227 = scalar_lea.sflag [#allocation5], %s226
        %s228 = sand.u32 %s134, 1
        %s229 = smul.addr %s228, 16
        %s230 = scalar_lea.vmem [#allocation6], %s229
        %p231 = scmp.eq.s32.totalorder %s26, 0
        // Predicated region
        $region41: #{tpu_custom_call.1} parent=35 // pred_check
          %p232 = pneg %p231
        $region42: #{tpu_custom_call.1} parent=35 // pred_check_branch
          %234 = sbr.rel (%p232) target = $region44
        $region43: #{tpu_custom_call.1} parent=35 // pred_region
          %235 = vst [vmem:[#allocation2] sm:$0xff] 0.0
        $region44: #{tpu_custom_call.1} parent=35 // pred_fallthru
          _
        %v236 = vld [vmem:[%s206] sm:$0xff]
        %v237 = vld [vmem:[%s1] sm:$0xff]
        %v238 = vld [vmem:[#allocation2] sm:$0xff]
        %v239 = vlaneseq
        %v240 = vand.u32 %v239, 127
        %242 = vset.pattern.permute.xlu0 4
        %243 = vperm.xlu0 %242, %v237
        %v244 = vpop.permute.xlu0 %243
        %v246 = vmul.f32 %v244, %v236
        %247 = vrot.lane.b32.xlu0 %v236, 4
        %v248 = vpop.permute.xlu0 %247
        %249 = vrot.lane.b32.xlu0 %v238, 4
        %v250 = vpop.permute.xlu0 %249
        %vm251 = vcmp.ge.s32.totalorder %v240, 4
        %v252 = vsel %vm251, %v248, %v250
        %253 = vset.pattern.permute.xlu0 0
        %254 = vperm.xlu0 %253, %v237
        %v255 = vpop.permute.xlu0 %254
        %v257 = vmul.f32 %v255, %v252
        %v258 = vadd.f32 %v246, %v257
        %259 = vrot.lane.b32.xlu0 %v236, 3
        %v260 = vpop.permute.xlu0 %259
        %261 = vrot.lane.b32.xlu0 %v238, 3
        %v262 = vpop.permute.xlu0 %261
        %vm263 = vcmp.ge.s32.totalorder %v240, 3
        %v264 = vsel %vm263, %v260, %v262
        %265 = vset.pattern.permute.xlu0 1
        %266 = vperm.xlu0 %265, %v237
        %v267 = vpop.permute.xlu0 %266
        %v269 = vmul.f32 %v267, %v264
        %v270 = vadd.f32 %v258, %v269
        %271 = vrot.lane.b32.xlu0 %v236, 2
        %v272 = vpop.permute.xlu0 %271
        %273 = vrot.lane.b32.xlu0 %v238, 2
        %v274 = vpop.permute.xlu0 %273
        %vm275 = vcmp.ge.s32.totalorder %v240, 2
        %v276 = vsel %vm275, %v272, %v274
        %277 = vset.pattern.permute.xlu0 2
        %278 = vperm.xlu0 %277, %v237
        %v279 = vpop.permute.xlu0 %278
        %v281 = vmul.f32 %v279, %v276
        %v282 = vadd.f32 %v270, %v281
        %283 = vrot.lane.b32.xlu0 %v236, 1
        %v284 = vpop.permute.xlu0 %283
        %285 = vrot.lane.b32.xlu0 %v238, 1
        %v286 = vpop.permute.xlu0 %285
        %vm287 = vcmp.ge.s32.totalorder %v240, 1
        %v288 = vsel %vm287, %v284, %v286
        %289 = vset.pattern.permute.xlu0 3
        %290 = vperm.xlu0 %289, %v237
        %v291 = vpop.permute.xlu0 %290
        %v293 = vmul.f32 %v291, %v288
        %v294 = vadd.f32 %v282, %v293
        %295 = vst [vmem:[#allocation2] sm:$0xff] %v236
        %v296 = vld [vmem:[%s2] sm:$0xff]
        %v297 = vld [vmem:[%s2 + $0x8] sm:$0xff]
        %v298 = vld [vmem:[%s3] sm:$0xff]
        %v299 = vld [vmem:[%s3 + $0x8] sm:$0xff]
        %301 = vset.pattern.permute.xlu0 0
        %302 = vperm.xlu0 %301, %v298
        %v303 = vpop.permute.xlu0 %302
        %306 = vset.pattern.permute.xlu0 0
        %307 = vperm.xlu0 %306, %v299
        %v308 = vpop.permute.xlu0 %307
        %vm310 = vcmask 64512
        %v312 = vsel %vm310, %v296, 0
        %v315 = vsel %vm310, %v297, 0
        %317 = vmatprep.subr.mxu0 0.0
        %318 = vmatpush1.msra.mxu0 %v294
        %319 = vmatprep.subr.mxu0 0.0
        %320 = vmatpush1.msra.mxu0 0.0
        %321 = vmatprep.subr.mxu0 0.0
        %322 = vmatpush1.msra.mxu0 0.0
        %323 = vmatprep.subr.mxu0 0.0
        %324 = vmatpush1.msra.mxu0 0.0
        %325 = vmatprep.subr.mxu0 0.0
        %326 = vmatpush1.msra.mxu0 0.0
        %327 = vmatprep.subr.mxu0 0.0
        %328 = vmatpush1.msra.mxu0 0.0
        %329 = vmatprep.subr.mxu0 0.0
        %330 = vmatpush1.msra.mxu0 0.0
        %331 = vmatprep.subr.mxu0 0.0
        %332 = vmatpush1.msra.mxu0 0.0
        %333 = vmatprep.subr.mxu0 0.0
        %334 = vmatpush1.msra.mxu0 0.0
        %335 = vmatprep.subr.mxu0 0.0
        %336 = vmatpush1.msra.mxu0 0.0
        %337 = vmatprep.subr.mxu0 0.0
        %338 = vmatpush1.msra.mxu0 0.0
        %339 = vmatprep.subr.mxu0 0.0
        %340 = vmatpush1.msra.mxu0 0.0
        %341 = vmatprep.subr.mxu0 0.0
        %342 = vmatpush1.msra.mxu0 0.0
        %343 = vmatprep.subr.mxu0 0.0
        %344 = vmatpush1.msra.mxu0 0.0
        %345 = vmatprep.subr.mxu0 0.0
        %346 = vmatpush1.msra.mxu0 0.0
        %347 = vmatprep.subr.mxu0 0.0
        %348 = vmatpush1.msra.mxu0 0.0
        %349 = vmatprep.subr.mxu0 0.0
        %350 = vmatpush1.msra.mxu0 0.0
        %351 = vmatprep.subr.mxu0 0.0
        %352 = vmatpush1.msra.mxu0 0.0
        %353 = vmatprep.subr.mxu0 0.0
        %354 = vmatpush1.msra.mxu0 0.0
        %355 = vmatprep.subr.mxu0 0.0
        %356 = vmatpush1.msra.mxu0 0.0
        %357 = vmatprep.subr.mxu0 0.0
        %358 = vmatpush1.msra.mxu0 0.0
        %359 = vmatprep.subr.mxu0 0.0
        %360 = vmatpush1.msra.mxu0 0.0
        %361 = vmatprep.subr.mxu0 0.0
        %362 = vmatpush1.msra.mxu0 0.0
        %363 = vmatprep.subr.mxu0 0.0
        %364 = vmatpush1.msra.mxu0 0.0
        %365 = vmatprep.subr.mxu0 0.0
        %366 = vmatpush1.msra.mxu0 0.0
        %367 = vmatprep.subr.mxu0 0.0
        %368 = vmatpush1.msra.mxu0 0.0
        %369 = vmatprep.subr.mxu0 0.0
        %370 = vmatpush1.msra.mxu0 0.0
        %371 = vmatprep.subr.mxu0 0.0
        %372 = vmatpush1.msra.mxu0 0.0
        %373 = vmatprep.subr.mxu0 0.0
        %374 = vmatpush1.msra.mxu0 0.0
        %375 = vmatprep.subr.mxu0 0.0
        %376 = vmatpush1.msra.mxu0 0.0
        %377 = vmatprep.subr.mxu0 0.0
        %378 = vmatpush1.msra.mxu0 0.0
        %379 = vmatprep.subr.mxu0 0.0
        %380 = vmatpush1.msra.mxu0 0.0
        %381 = vmatprep.mubr.f32.mxu0 0.0
        %382 = vmatmul.mubr.f32.gmra.mrb[0].mxu0 %v312
        %v383 = vpop.f32.mrb[0].mxu0
        %v384 = vadd.f32 %v303, %v383
        %v385 = vpop.f32.mrb[0].mxu0
        %386 = vmatprep.mubr.f32.mxu0 0.0
        %387 = vmatmul.mubr.f32.gmra.mrb[0].mxu0 %v315
        %v388 = vpop.f32.mrb[0].mxu0
        %v389 = vadd.f32 %v308, %v388
        %v390 = vpop.f32.mrb[0].mxu0
        %391 = vdwg.mxu0
        %392 = vst [vmem:[%s230] sm:$0xff] %v384
        %393 = vst [vmem:[%s230 + $0x8] sm:$0xff] %v389
        %s394 = sand.u32 %s134, 1
        %s395 = scalar_lea.sflag [#allocation5], %s394
        %s396 = sand.u32 %s134, 1
        %s397 = smul.addr %s396, 16
        %s398 = scalar_lea.vmem [#allocation6], %s397
        // Predicated region
        $region45: #{tpu_custom_call.1} parent=35 // pred_check
          %p399 = pneg %p144
        $region46: #{tpu_custom_call.1} parent=35 // pred_check_branch
          %401 = sbr.rel (%p399) target = $region48
        $region47: #{tpu_custom_call.1} parent=35 // pred_region
          %s403 = ssub.s32 256, 256
          %404 = vsyncadd %s395, %s403
          %s405 = smul.addr %s25, 6
          %s406 = sadd.s32 %s26, %s405
          %s407 = smul.addr %s406, 128
          %s408 = scalar_lea.hbm %s4, %s407
          %s409 = sshll.u32 %s398, 4
          %s410 = int_to_ptr.vmem [resolvable:$true] %s409
          %415 = dma.vmem_to_hbm [thread:$0]  %s410, 256, %s408, %s395, 128, 384, 8
        $region48: #{tpu_custom_call.1} parent=35 // pred_fallthru
          _
      $region36: #{tpu_custom_call.1} parent=5 // pred_fallthru
        _
      %p416 = scmp.le.s32.totalorder 2, %s16
      // Predicated region
      $region49: #{tpu_custom_call.1} parent=5 // pred_check
        %p417 = pneg %p416
      $region50: #{tpu_custom_call.1} parent=5 // pred_check_branch
        %419 = sbr.rel (%p417) target = $region52
      $region51: #{tpu_custom_call.1} parent=5 // pred_region
        %s420 = ssub.s32 %s16, 2
        // Predicated region
        $region53: #{tpu_custom_call.1} parent=51 // pred_check
          %p421 = pneg %p150
        $region54: #{tpu_custom_call.1} parent=51 // pred_check_branch
          %423 = sbr.rel (%p421) target = $region56
        $region55: #{tpu_custom_call.1} parent=51 // pred_region
          %s424 = sand.u32 %s135, 1
          %s425 = scalar_lea.sflag [#allocation5], %s424
          %s426 = sand.u32 %s135, 1
          %s427 = smul.addr %s426, 16
          %s428 = scalar_lea.vmem [#allocation6], %s427
          %429 = dma.done %s425, 256
        $region56: #{tpu_custom_call.1} parent=51 // pred_fallthru
          _
      $region52: #{tpu_custom_call.1} parent=5 // pred_fallthru
        _
    $region6: #{tpu_custom_call.1} parent=1 // loop_footer
      %s20 = sadd.s32 1, %s16
    $region7: #{tpu_custom_call.1} parent=1 // loop_footer_branch
      %15 = sbr.rel target = $region3
    $region8: #{tpu_custom_call.1} parent=1 // loop_exit
      _
    %430 = vsyncpa [#allocation4], 1
    %s431 = scalar_lea.sflag [#allocation4], 1
    %432 = vsyncpa %s431, 1
    %433 = vsyncpa [#allocation5], 1
    %s434 = scalar_lea.sflag [#allocation5], 1
    %435 = vsyncpa %s434, 1

</llo_original>
